<compile_context>
chip_gen: v7x
topology: tpu7x:2x2x1
jax: 0.10.0
libtpu: 0.0.40
codegen_flags: <defaults>
</compile_context>

<pallas_src>
import functools

import jax
import jax.numpy as jnp
from jax.experimental import pallas as pl
from jax.experimental.pallas import tpu as pltpu

INDIM = 5
OUTDIM = 1
_SLOPE = 0.01  # PyTorch nn.LeakyReLU default negative_slope

# Flat SMEM parameter layout (36 f32 scalars):
#   [0:25)  w1 = fc1.weight, row-major (out=5, in=5)
#   [25:30) b1 = fc1.bias
#   [30:35) w2 = fc2.weight (out=1, in=5)
#   [35]    b2 = fc2.bias
_W1_OFF = 0
_B1_OFF = INDIM * INDIM
_W2_OFF = _B1_OFF + INDIM
_B2_OFF = _W2_OFF + INDIM
_NPARAMS = _B2_OFF + OUTDIM


def _basic_decoding_kernel(p_ref, x_ref, o_ref):
    # p_ref : SMEM f32[36]            — weight/bias scalars
    # x_ref : VMEM (INDIM, P, 128)    — P dense planes of 128 batch cols/feature
    # o_ref : VMEM (P, 128)           — dense output planes (full 8x128 vregs)
    xs = [x_ref[c] for c in range(INDIM)]  # 5 x (P, 128)

    out = None
    for r in range(INDIM):
        # h_r = b1[r] + sum_c W1[r, c] * x_c   (VPU broadcast-FMA, no MXU)
        h = xs[0] * p_ref[_W1_OFF + r * INDIM]
        for c in range(1, INDIM):
            h = h + xs[c] * p_ref[_W1_OFF + r * INDIM + c]
        h = h + p_ref[_B1_OFF + r]
        h = jnp.maximum(h, _SLOPE * h)  # LeakyReLU (slope < 1)
        contrib = h * p_ref[_W2_OFF + r]
        out = contrib if out is None else out + contrib

    o_ref[...] = out + p_ref[_B2_OFF]


def _round_up(a, m):
    return ((a + m - 1) // m) * m


def _cdiv(a, b):
    return (a + b - 1) // b


@functools.partial(jax.jit, static_argnames=("target_steps", "max_planes"))
def basic_decoding_pallas(x, params_flat, *, target_steps=8, max_planes=3072):
    """x: (n, 5) f32, params_flat: (36,) f32 -> (n, 1) f32 (BasicDecoding.forward)."""
    n = x.shape[0]
    assert x.shape == (n, INDIM)
    assert params_flat.shape == (_NPARAMS,)
    assert max_planes % 8 == 0 and max_planes >= 8

    # ---- tiling: 128-wide batch planes, P planes per grid step ----
    s_total = max(_cdiv(max(n, 1), 128), 1)
    p = _round_up(_cdiv(s_total, target_steps), 8)
    if p > max_planes:
        # Respect the per-step VMEM cap, then rebalance so padding stays small.
        grid = _cdiv(s_total, max_planes)
        p = _round_up(_cdiv(s_total, grid), 8)
    grid = _cdiv(s_total, p)
    s_pad = grid * p
    n_pad = s_pad * 128

    # Layout plumbing (one extra HBM pass over x).
    # TODO(synk): have the producer emit x already in (INDIM, n) layout — for a
    # bandwidth-bound kernel this transpose+pad costs about as much HBM traffic
    # as the kernel itself.
    xT = x.T
    if n_pad != n:
        xT = jnp.pad(xT, ((0, 0), (0, n_pad - n)))
    x_planes = xT.reshape(INDIM, s_pad, 128)

    # Double-buffered input + output tiles, plus headroom.
    vmem_limit = 2 * (INDIM + 1) * p * 128 * 4 + (8 << 20)

    o_planes = pl.pallas_call(
        _basic_decoding_kernel,
        out_shape=jax.ShapeDtypeStruct((s_pad, 128), jnp.float32),
        grid=(grid,),
        in_specs=[
            pl.BlockSpec(memory_space=pltpu.MemorySpace.SMEM),   # 36 scalars
            pl.BlockSpec((INDIM, p, 128), lambda i: (0, i, 0)),  # streaming x
        ],
        out_specs=pl.BlockSpec((p, 128), lambda i: (i, 0)),      # dense output
        compiler_params=pltpu.CompilerParams(
            dimension_semantics=("parallel",),
            vmem_limit_bytes=int(vmem_limit),
        ),
        cost_estimate=pl.CostEstimate(
            flops=60 * n_pad,
            bytes_accessed=24 * n_pad,
            transcendentals=0,
        ),
    )(params_flat, x_planes)

    return o_planes.reshape(-1)[:n].reshape(n, OUTDIM)


def make_params(key):
    """Deterministic PyTorch nn.Linear-style parameters."""
    k0, k1, k2, k3 = jax.random.split(key, 4)
    bound = 1.0 / (INDIM ** 0.5)
    w1 = jax.random.uniform(k0, (INDIM, INDIM), jnp.float32, -bound, bound)
    b1 = jax.random.uniform(k1, (INDIM,), jnp.float32, -bound, bound)
    w2 = jax.random.uniform(k2, (OUTDIM, INDIM), jnp.float32, -bound, bound)
    b2 = jax.random.uniform(k3, (OUTDIM,), jnp.float32, -bound, bound)
    return w1, b1, w2, b2


def flatten_params(params):
    w1, b1, w2, b2 = params
    return jnp.concatenate(
        [w1.reshape(-1), b1.reshape(-1), w2.reshape(-1), b2.reshape(-1)]
    ).astype(jnp.float32)


def basic_decoding_ref(x, params):
    """Pure-JAX reference matching the PyTorch forward (y = x @ W.T + b)."""
    w1, b1, w2, b2 = params
    h = x @ w1.T + b1
    h = jnp.where(h > 0, h, _SLOPE * h)
    return h @ w2.T + b2


if __name__ == "__main__":
    key = jax.random.PRNGKey(0)
    k_params, k_x1, k_x2 = jax.random.split(key, 3)
    params = make_params(k_params)
    params_flat = flatten_params(params)

    # Case 1: small, non-multiple-of-128 batch (exercises padding, grid=1).
    n1 = 200
    x1 = jax.random.normal(k_x1, (n1, INDIM), jnp.float32)
    out1 = jax.block_until_ready(basic_decoding_pallas(x1, params_flat))
    ref1 = basic_decoding_ref(x1, params)
    assert out1.shape == (n1, OUTDIM)
    assert jnp.allclose(out1, ref1, atol=1e-5, rtol=1e-5)

    # Case 2: larger batch that produces a multi-step grid (exercises the
    # parallel grid axis and plane rebalancing), still small overall.
    n2 = 2500
    x2 = jax.random.normal(k_x2, (n2, INDIM), jnp.float32)
    out2 = jax.block_until_ready(basic_decoding_pallas(x2, params_flat))
    ref2 = basic_decoding_ref(x2, params)
    assert out2.shape == (n2, OUTDIM)
    assert jnp.allclose(out2, ref2, atol=1e-5, rtol=1e-5)

    print("KERNEL_OK")
</pallas_src>

<mosaic_0001>
module attributes {stable_mosaic.version = 11 : i64} {
  func.func @_basic_decoding_kernel(%arg0: i32, %arg1: memref<36xf32, #tpu.memory_space<smem>>, %arg2: memref<5x8x128xf32, #tpu.memory_space<vmem>>, %arg3: memref<8x128xf32, #tpu.memory_space<vmem>>) attributes {dimension_semantics = [#tpu.dimension_semantics<parallel>], iteration_bounds = array<i64: 1>, scalar_prefetch = 0 : i64, scratch_operands = 0 : i64, tpu.core_type = #tpu.core_type<tc>, window_params = [{transform_indices = @transform_0, window_bounds = array<i64: 36>}, {transform_indices = @transform_1, window_bounds = array<i64: 5, 8, 128>}, {transform_indices = @transform_2, window_bounds = array<i64: 8, 128>}]} {
    %c0 = arith.constant 0 : index
    %c0_0 = arith.constant 0 : index
    %c0_1 = arith.constant 0 : index
    %0 = vector.load %arg2[%c0, %c0_0, %c0_1] : memref<5x8x128xf32, #tpu.memory_space<vmem>>, vector<1x8x128xf32>
    %1 = vector.shape_cast %0 : vector<1x8x128xf32> to vector<8x128xf32>
    %c1 = arith.constant 1 : index
    %c0_2 = arith.constant 0 : index
    %c0_3 = arith.constant 0 : index
    %2 = vector.load %arg2[%c1, %c0_2, %c0_3] : memref<5x8x128xf32, #tpu.memory_space<vmem>>, vector<1x8x128xf32>
    %3 = vector.shape_cast %2 : vector<1x8x128xf32> to vector<8x128xf32>
    %c2 = arith.constant 2 : index
    %c0_4 = arith.constant 0 : index
    %c0_5 = arith.constant 0 : index
    %4 = vector.load %arg2[%c2, %c0_4, %c0_5] : memref<5x8x128xf32, #tpu.memory_space<vmem>>, vector<1x8x128xf32>
    %5 = vector.shape_cast %4 : vector<1x8x128xf32> to vector<8x128xf32>
    %c3 = arith.constant 3 : index
    %c0_6 = arith.constant 0 : index
    %c0_7 = arith.constant 0 : index
    %6 = vector.load %arg2[%c3, %c0_6, %c0_7] : memref<5x8x128xf32, #tpu.memory_space<vmem>>, vector<1x8x128xf32>
    %7 = vector.shape_cast %6 : vector<1x8x128xf32> to vector<8x128xf32>
    %c4 = arith.constant 4 : index
    %c0_8 = arith.constant 0 : index
    %c0_9 = arith.constant 0 : index
    %8 = vector.load %arg2[%c4, %c0_8, %c0_9] : memref<5x8x128xf32, #tpu.memory_space<vmem>>, vector<1x8x128xf32>
    %9 = vector.shape_cast %8 : vector<1x8x128xf32> to vector<8x128xf32>
    %c0_10 = arith.constant 0 : index
    %10 = memref.load %arg1[%c0_10] : memref<36xf32, #tpu.memory_space<smem>>
    %11 = vector.broadcast %10 : f32 to vector<8x128xf32>
    %12 = arith.mulf %1, %11 : vector<8x128xf32>
    %c1_11 = arith.constant 1 : index
    %13 = memref.load %arg1[%c1_11] : memref<36xf32, #tpu.memory_space<smem>>
    %14 = vector.broadcast %13 : f32 to vector<8x128xf32>
    %15 = arith.mulf %3, %14 : vector<8x128xf32>
    %16 = arith.addf %12, %15 : vector<8x128xf32>
    %c2_12 = arith.constant 2 : index
    %17 = memref.load %arg1[%c2_12] : memref<36xf32, #tpu.memory_space<smem>>
    %18 = vector.broadcast %17 : f32 to vector<8x128xf32>
    %19 = arith.mulf %5, %18 : vector<8x128xf32>
    %20 = arith.addf %16, %19 : vector<8x128xf32>
    %c3_13 = arith.constant 3 : index
    %21 = memref.load %arg1[%c3_13] : memref<36xf32, #tpu.memory_space<smem>>
    %22 = vector.broadcast %21 : f32 to vector<8x128xf32>
    %23 = arith.mulf %7, %22 : vector<8x128xf32>
    %24 = arith.addf %20, %23 : vector<8x128xf32>
    %c4_14 = arith.constant 4 : index
    %25 = memref.load %arg1[%c4_14] : memref<36xf32, #tpu.memory_space<smem>>
    %26 = vector.broadcast %25 : f32 to vector<8x128xf32>
    %27 = arith.mulf %9, %26 : vector<8x128xf32>
    %28 = arith.addf %24, %27 : vector<8x128xf32>
    %c25 = arith.constant 25 : index
    %29 = memref.load %arg1[%c25] : memref<36xf32, #tpu.memory_space<smem>>
    %30 = vector.broadcast %29 : f32 to vector<8x128xf32>
    %31 = arith.addf %28, %30 : vector<8x128xf32>
    %cst = arith.constant 0.00999999977 : f32
    %32 = vector.broadcast %cst : f32 to vector<8x128xf32>
    %33 = arith.mulf %32, %31 : vector<8x128xf32>
    %34 = arith.maximumf %31, %33 : vector<8x128xf32>
    %c30 = arith.constant 30 : index
    %35 = memref.load %arg1[%c30] : memref<36xf32, #tpu.memory_space<smem>>
    %36 = vector.broadcast %35 : f32 to vector<8x128xf32>
    %37 = arith.mulf %34, %36 : vector<8x128xf32>
    %c5 = arith.constant 5 : index
    %38 = memref.load %arg1[%c5] : memref<36xf32, #tpu.memory_space<smem>>
    %39 = vector.broadcast %38 : f32 to vector<8x128xf32>
    %40 = arith.mulf %1, %39 : vector<8x128xf32>
    %c6 = arith.constant 6 : index
    %41 = memref.load %arg1[%c6] : memref<36xf32, #tpu.memory_space<smem>>
    %42 = vector.broadcast %41 : f32 to vector<8x128xf32>
    %43 = arith.mulf %3, %42 : vector<8x128xf32>
    %44 = arith.addf %40, %43 : vector<8x128xf32>
    %c7 = arith.constant 7 : index
    %45 = memref.load %arg1[%c7] : memref<36xf32, #tpu.memory_space<smem>>
    %46 = vector.broadcast %45 : f32 to vector<8x128xf32>
    %47 = arith.mulf %5, %46 : vector<8x128xf32>
    %48 = arith.addf %44, %47 : vector<8x128xf32>
    %c8 = arith.constant 8 : index
    %49 = memref.load %arg1[%c8] : memref<36xf32, #tpu.memory_space<smem>>
    %50 = vector.broadcast %49 : f32 to vector<8x128xf32>
    %51 = arith.mulf %7, %50 : vector<8x128xf32>
    %52 = arith.addf %48, %51 : vector<8x128xf32>
    %c9 = arith.constant 9 : index
    %53 = memref.load %arg1[%c9] : memref<36xf32, #tpu.memory_space<smem>>
    %54 = vector.broadcast %53 : f32 to vector<8x128xf32>
    %55 = arith.mulf %9, %54 : vector<8x128xf32>
    %56 = arith.addf %52, %55 : vector<8x128xf32>
    %c26 = arith.constant 26 : index
    %57 = memref.load %arg1[%c26] : memref<36xf32, #tpu.memory_space<smem>>
    %58 = vector.broadcast %57 : f32 to vector<8x128xf32>
    %59 = arith.addf %56, %58 : vector<8x128xf32>
    %cst_15 = arith.constant 0.00999999977 : f32
    %60 = vector.broadcast %cst_15 : f32 to vector<8x128xf32>
    %61 = arith.mulf %60, %59 : vector<8x128xf32>
    %62 = arith.maximumf %59, %61 : vector<8x128xf32>
    %c31 = arith.constant 31 : index
    %63 = memref.load %arg1[%c31] : memref<36xf32, #tpu.memory_space<smem>>
    %64 = vector.broadcast %63 : f32 to vector<8x128xf32>
    %65 = arith.mulf %62, %64 : vector<8x128xf32>
    %66 = arith.addf %37, %65 : vector<8x128xf32>
    %c10 = arith.constant 10 : index
    %67 = memref.load %arg1[%c10] : memref<36xf32, #tpu.memory_space<smem>>
    %68 = vector.broadcast %67 : f32 to vector<8x128xf32>
    %69 = arith.mulf %1, %68 : vector<8x128xf32>
    %c11 = arith.constant 11 : index
    %70 = memref.load %arg1[%c11] : memref<36xf32, #tpu.memory_space<smem>>
    %71 = vector.broadcast %70 : f32 to vector<8x128xf32>
    %72 = arith.mulf %3, %71 : vector<8x128xf32>
    %73 = arith.addf %69, %72 : vector<8x128xf32>
    %c12 = arith.constant 12 : index
    %74 = memref.load %arg1[%c12] : memref<36xf32, #tpu.memory_space<smem>>
    %75 = vector.broadcast %74 : f32 to vector<8x128xf32>
    %76 = arith.mulf %5, %75 : vector<8x128xf32>
    %77 = arith.addf %73, %76 : vector<8x128xf32>
    %c13 = arith.constant 13 : index
    %78 = memref.load %arg1[%c13] : memref<36xf32, #tpu.memory_space<smem>>
    %79 = vector.broadcast %78 : f32 to vector<8x128xf32>
    %80 = arith.mulf %7, %79 : vector<8x128xf32>
    %81 = arith.addf %77, %80 : vector<8x128xf32>
    %c14 = arith.constant 14 : index
    %82 = memref.load %arg1[%c14] : memref<36xf32, #tpu.memory_space<smem>>
    %83 = vector.broadcast %82 : f32 to vector<8x128xf32>
    %84 = arith.mulf %9, %83 : vector<8x128xf32>
    %85 = arith.addf %81, %84 : vector<8x128xf32>
    %c27 = arith.constant 27 : index
    %86 = memref.load %arg1[%c27] : memref<36xf32, #tpu.memory_space<smem>>
    %87 = vector.broadcast %86 : f32 to vector<8x128xf32>
    %88 = arith.addf %85, %87 : vector<8x128xf32>
    %cst_16 = arith.constant 0.00999999977 : f32
    %89 = vector.broadcast %cst_16 : f32 to vector<8x128xf32>
    %90 = arith.mulf %89, %88 : vector<8x128xf32>
    %91 = arith.maximumf %88, %90 : vector<8x128xf32>
    %c32 = arith.constant 32 : index
    %92 = memref.load %arg1[%c32] : memref<36xf32, #tpu.memory_space<smem>>
    %93 = vector.broadcast %92 : f32 to vector<8x128xf32>
    %94 = arith.mulf %91, %93 : vector<8x128xf32>
    %95 = arith.addf %66, %94 : vector<8x128xf32>
    %c15 = arith.constant 15 : index
    %96 = memref.load %arg1[%c15] : memref<36xf32, #tpu.memory_space<smem>>
    %97 = vector.broadcast %96 : f32 to vector<8x128xf32>
    %98 = arith.mulf %1, %97 : vector<8x128xf32>
    %c16 = arith.constant 16 : index
    %99 = memref.load %arg1[%c16] : memref<36xf32, #tpu.memory_space<smem>>
    %100 = vector.broadcast %99 : f32 to vector<8x128xf32>
    %101 = arith.mulf %3, %100 : vector<8x128xf32>
    %102 = arith.addf %98, %101 : vector<8x128xf32>
    %c17 = arith.constant 17 : index
    %103 = memref.load %arg1[%c17] : memref<36xf32, #tpu.memory_space<smem>>
    %104 = vector.broadcast %103 : f32 to vector<8x128xf32>
    %105 = arith.mulf %5, %104 : vector<8x128xf32>
    %106 = arith.addf %102, %105 : vector<8x128xf32>
    %c18 = arith.constant 18 : index
    %107 = memref.load %arg1[%c18] : memref<36xf32, #tpu.memory_space<smem>>
    %108 = vector.broadcast %107 : f32 to vector<8x128xf32>
    %109 = arith.mulf %7, %108 : vector<8x128xf32>
    %110 = arith.addf %106, %109 : vector<8x128xf32>
    %c19 = arith.constant 19 : index
    %111 = memref.load %arg1[%c19] : memref<36xf32, #tpu.memory_space<smem>>
    %112 = vector.broadcast %111 : f32 to vector<8x128xf32>
    %113 = arith.mulf %9, %112 : vector<8x128xf32>
    %114 = arith.addf %110, %113 : vector<8x128xf32>
    %c28 = arith.constant 28 : index
    %115 = memref.load %arg1[%c28] : memref<36xf32, #tpu.memory_space<smem>>
    %116 = vector.broadcast %115 : f32 to vector<8x128xf32>
    %117 = arith.addf %114, %116 : vector<8x128xf32>
    %cst_17 = arith.constant 0.00999999977 : f32
    %118 = vector.broadcast %cst_17 : f32 to vector<8x128xf32>
    %119 = arith.mulf %118, %117 : vector<8x128xf32>
    %120 = arith.maximumf %117, %119 : vector<8x128xf32>
    %c33 = arith.constant 33 : index
    %121 = memref.load %arg1[%c33] : memref<36xf32, #tpu.memory_space<smem>>
    %122 = vector.broadcast %121 : f32 to vector<8x128xf32>
    %123 = arith.mulf %120, %122 : vector<8x128xf32>
    %124 = arith.addf %95, %123 : vector<8x128xf32>
    %c20 = arith.constant 20 : index
    %125 = memref.load %arg1[%c20] : memref<36xf32, #tpu.memory_space<smem>>
    %126 = vector.broadcast %125 : f32 to vector<8x128xf32>
    %127 = arith.mulf %1, %126 : vector<8x128xf32>
    %c21 = arith.constant 21 : index
    %128 = memref.load %arg1[%c21] : memref<36xf32, #tpu.memory_space<smem>>
    %129 = vector.broadcast %128 : f32 to vector<8x128xf32>
    %130 = arith.mulf %3, %129 : vector<8x128xf32>
    %131 = arith.addf %127, %130 : vector<8x128xf32>
    %c22 = arith.constant 22 : index
    %132 = memref.load %arg1[%c22] : memref<36xf32, #tpu.memory_space<smem>>
    %133 = vector.broadcast %132 : f32 to vector<8x128xf32>
    %134 = arith.mulf %5, %133 : vector<8x128xf32>
    %135 = arith.addf %131, %134 : vector<8x128xf32>
    %c23 = arith.constant 23 : index
    %136 = memref.load %arg1[%c23] : memref<36xf32, #tpu.memory_space<smem>>
    %137 = vector.broadcast %136 : f32 to vector<8x128xf32>
    %138 = arith.mulf %7, %137 : vector<8x128xf32>
    %139 = arith.addf %135, %138 : vector<8x128xf32>
    %c24 = arith.constant 24 : index
    %140 = memref.load %arg1[%c24] : memref<36xf32, #tpu.memory_space<smem>>
    %141 = vector.broadcast %140 : f32 to vector<8x128xf32>
    %142 = arith.mulf %9, %141 : vector<8x128xf32>
    %143 = arith.addf %139, %142 : vector<8x128xf32>
    %c29 = arith.constant 29 : index
    %144 = memref.load %arg1[%c29] : memref<36xf32, #tpu.memory_space<smem>>
    %145 = vector.broadcast %144 : f32 to vector<8x128xf32>
    %146 = arith.addf %143, %145 : vector<8x128xf32>
    %cst_18 = arith.constant 0.00999999977 : f32
    %147 = vector.broadcast %cst_18 : f32 to vector<8x128xf32>
    %148 = arith.mulf %147, %146 : vector<8x128xf32>
    %149 = arith.maximumf %146, %148 : vector<8x128xf32>
    %c34 = arith.constant 34 : index
    %150 = memref.load %arg1[%c34] : memref<36xf32, #tpu.memory_space<smem>>
    %151 = vector.broadcast %150 : f32 to vector<8x128xf32>
    %152 = arith.mulf %149, %151 : vector<8x128xf32>
    %153 = arith.addf %124, %152 : vector<8x128xf32>
    %c35 = arith.constant 35 : index
    %154 = memref.load %arg1[%c35] : memref<36xf32, #tpu.memory_space<smem>>
    %155 = vector.broadcast %154 : f32 to vector<8x128xf32>
    %156 = arith.addf %153, %155 : vector<8x128xf32>
    %c0_19 = arith.constant 0 : index
    %c0_20 = arith.constant 0 : index
    %157 = vector.load %arg3[%c0_19, %c0_20] : memref<8x128xf32, #tpu.memory_space<vmem>>, vector<8x128xf32>
    tpu.vector_store %arg3[%c0_19, %c0_20], %156 {strides = array<i32>} : memref<8x128xf32, #tpu.memory_space<vmem>>, vector<8x128xf32>,
    return
  }
  func.func @transform_0(%arg0: i32) -> i32 {
    %c0_i32 = arith.constant 0 : i32
    %c0_i32_0 = arith.constant 0 : i32
    return %c0_i32 : i32
  }
  func.func @transform_1(%arg0: i32) -> (i32, i32, i32) {
    %c0_i32 = arith.constant 0 : i32
    %c0_i32_0 = arith.constant 0 : i32
    %c0_i32_1 = arith.constant 0 : i32
    return %c0_i32, %arg0, %c0_i32_0 : i32, i32, i32
  }
  func.func @transform_2(%arg0: i32) -> (i32, i32) {
    %c0_i32 = arith.constant 0 : i32
    %c0_i32_0 = arith.constant 0 : i32
    return %arg0, %c0_i32 : i32, i32
  }
}

</mosaic_0001>

<llo_original>
// kernel: basic_decoding_pallas.1
$region0: #{basic_decoding_pallas.1}
  #allocation0 [shape = 'u32[]', space=smem, size = 0x4, offset = 0x4, fixed_abs, tag = 'smem constant byte address 0x4 - core index']
  #allocation1 [shape = 'u32[144,128]{1,0:T(1,128)}', space=vmem, size = 0x12000, scoped, tag = 'internal scratch']
  %s0 = inlined_call_operand.vmem [shape: f32[36], index: 0, kind: input, shape index: {}]
  %s1 = inlined_call_operand.vmem [shape: f32[5,8,128], index: 1, kind: input, shape index: {}]
  %s2 = inlined_call_operand.vmem [shape: f32[8,128], index: 2, kind: output, shape index: {}]
  %s3 = sld [smem:[#allocation0]]
  $region22: #{basic_decoding_pallas.1} parent=0
    _
  %s5 = ssub.s32 1, %s3
  %s6 = scalar_select 0, %s5, %s3
  $region1: #{basic_decoding_pallas.1} parent=0
    #allocation2 [shape = 'u8[512]{0}', space=smem, size = 0x200, scoped, tag = 'input window, operand 0, single buffered']
    #allocation3 [shape = 's32[1]{0}', space=sflag, size = 0x4, scoped, tag = 'scoped memory for basic_decoding_pallas.1']
    %7 = vsyncpa [#allocation3], 0
    // Predicated region
    $region2: #{basic_decoding_pallas.1} parent=1 // pred_check
      _
    $region3: #{basic_decoding_pallas.1} parent=1 // pred_check_branch
      %9 = sbr.rel (0) target = $region5
    $region4: #{basic_decoding_pallas.1} parent=1 // pred_region
      %s11 = ssub.s32 16, 16
      %12 = vsyncadd [#allocation3], %s11
      %s14 = sshll.u32 %s0, 4
      %s15 = int_to_ptr.vmem [resolvable:$true] %s14
      %17 = dma.vmem_to_smem %s15, 16, [#allocation2], [#allocation3]
    $region5: #{basic_decoding_pallas.1} parent=1 // pred_fallthru
      _
    // Predicated region
    $region6: #{basic_decoding_pallas.1} parent=1 // pred_check
      _
    $region7: #{basic_decoding_pallas.1} parent=1 // pred_check_branch
      %19 = sbr.rel (0) target = $region9
    $region8: #{basic_decoding_pallas.1} parent=1 // pred_region
      _
    $region9: #{basic_decoding_pallas.1} parent=1 // pred_fallthru
      _
    // Predicated region
    $region10: #{basic_decoding_pallas.1} parent=1 // pred_check
      _
    $region11: #{basic_decoding_pallas.1} parent=1 // pred_check_branch
      %21 = sbr.rel (0) target = $region13
    $region12: #{basic_decoding_pallas.1} parent=1 // pred_region
      %22 = dma.done [#allocation3], 16
    $region13: #{basic_decoding_pallas.1} parent=1 // pred_fallthru
      _
    %23 = sfence
    %v24 = vld [vmem:[%s1] sm:$0xff]
    %s25 = scalar_lea.vmem %s1, 8
    %v26 = vld [vmem:[%s25] sm:$0xff]
    %s27 = scalar_lea.vmem %s1, 16
    %v28 = vld [vmem:[%s27] sm:$0xff]
    %s29 = scalar_lea.vmem %s1, 24
    %v30 = vld [vmem:[%s29] sm:$0xff]
    %s31 = scalar_lea.vmem %s1, 32
    %v32 = vld [vmem:[%s31] sm:$0xff]
    %s33 = sld [smem:[#allocation2]]
    %v34 = vstv %s33
    %v35 = vmul.f32 %v24, %v34
    %s36 = sld [smem:[#allocation2 + $0x1]]
    %v37 = vstv %s36
    %v38 = vmul.f32 %v26, %v37
    %v39 = vadd.f32 %v35, %v38
    %s40 = sld [smem:[#allocation2 + $0x2]]
    %v41 = vstv %s40
    %v42 = vmul.f32 %v28, %v41
    %v43 = vadd.f32 %v39, %v42
    %s44 = sld [smem:[#allocation2 + $0x3]]
    %v45 = vstv %s44
    %v46 = vmul.f32 %v30, %v45
    %v47 = vadd.f32 %v43, %v46
    %s48 = sld [smem:[#allocation2 + $0x4]]
    %v49 = vstv %s48
    %v50 = vmul.f32 %v32, %v49
    %v51 = vadd.f32 %v47, %v50
    %s52 = sld [smem:[#allocation2 + $0x19]]
    %v53 = vstv %s52
    %v54 = vadd.f32 %v51, %v53
    %v55 = vmul.f32 %v54, 0.01
    %v56 = vmax.f32 %v54, %v55
    %s57 = sld [smem:[#allocation2 + $0x1e]]
    %v58 = vstv %s57
    %v59 = vmul.f32 %v56, %v58
    %s60 = sld [smem:[#allocation2 + $0x5]]
    %v61 = vstv %s60
    %v62 = vmul.f32 %v24, %v61
    %s63 = sld [smem:[#allocation2 + $0x6]]
    %v64 = vstv %s63
    %v65 = vmul.f32 %v26, %v64
    %v66 = vadd.f32 %v62, %v65
    %s67 = sld [smem:[#allocation2 + $0x7]]
    %v68 = vstv %s67
    %v69 = vmul.f32 %v28, %v68
    %v70 = vadd.f32 %v66, %v69
    %s71 = sld [smem:[#allocation2 + $0x8]]
    %v72 = vstv %s71
    %v73 = vmul.f32 %v30, %v72
    %v74 = vadd.f32 %v70, %v73
    %s75 = sld [smem:[#allocation2 + $0x9]]
    %v76 = vstv %s75
    %v77 = vmul.f32 %v32, %v76
    %v78 = vadd.f32 %v74, %v77
    %s79 = sld [smem:[#allocation2 + $0x1a]]
    %v80 = vstv %s79
    %v81 = vadd.f32 %v78, %v80
    %v82 = vmul.f32 %v81, 0.01
    %v83 = vmax.f32 %v81, %v82
    %s84 = sld [smem:[#allocation2 + $0x1f]]
    %v85 = vstv %s84
    %v86 = vmul.f32 %v83, %v85
    %v87 = vadd.f32 %v59, %v86
    %s88 = sld [smem:[#allocation2 + $0xa]]
    %v89 = vstv %s88
    %v90 = vmul.f32 %v24, %v89
    %s91 = sld [smem:[#allocation2 + $0xb]]
    %v92 = vstv %s91
    %v93 = vmul.f32 %v26, %v92
    %v94 = vadd.f32 %v90, %v93
    %s95 = sld [smem:[#allocation2 + $0xc]]
    %v96 = vstv %s95
    %v97 = vmul.f32 %v28, %v96
    %v98 = vadd.f32 %v94, %v97
    %s99 = sld [smem:[#allocation2 + $0xd]]
    %v100 = vstv %s99
    %v101 = vmul.f32 %v30, %v100
    %v102 = vadd.f32 %v98, %v101
    %s103 = sld [smem:[#allocation2 + $0xe]]
    %v104 = vstv %s103
    %v105 = vmul.f32 %v32, %v104
    %v106 = vadd.f32 %v102, %v105
    %s107 = sld [smem:[#allocation2 + $0x1b]]
    %v108 = vstv %s107
    %v109 = vadd.f32 %v106, %v108
    %v110 = vmul.f32 %v109, 0.01
    %v111 = vmax.f32 %v109, %v110
    %s112 = sld [smem:[#allocation2 + $0x20]]
    %v113 = vstv %s112
    %v114 = vmul.f32 %v111, %v113
    %v115 = vadd.f32 %v87, %v114
    %s116 = sld [smem:[#allocation2 + $0xf]]
    %v117 = vstv %s116
    %v118 = vmul.f32 %v24, %v117
    %s119 = sld [smem:[#allocation2 + $0x10]]
    %v120 = vstv %s119
    %v121 = vmul.f32 %v26, %v120
    %v122 = vadd.f32 %v118, %v121
    %s123 = sld [smem:[#allocation2 + $0x11]]
    %v124 = vstv %s123
    %v125 = vmul.f32 %v28, %v124
    %v126 = vadd.f32 %v122, %v125
    %s127 = sld [smem:[#allocation2 + $0x12]]
    %v128 = vstv %s127
    %v129 = vmul.f32 %v30, %v128
    %v130 = vadd.f32 %v126, %v129
    %s131 = sld [smem:[#allocation2 + $0x13]]
    %v132 = vstv %s131
    %v133 = vmul.f32 %v32, %v132
    %v134 = vadd.f32 %v130, %v133
    %s135 = sld [smem:[#allocation2 + $0x1c]]
    %v136 = vstv %s135
    %v137 = vadd.f32 %v134, %v136
    %v138 = vmul.f32 %v137, 0.01
    %v139 = vmax.f32 %v137, %v138
    %s140 = sld [smem:[#allocation2 + $0x21]]
    %v141 = vstv %s140
    %v142 = vmul.f32 %v139, %v141
    %v143 = vadd.f32 %v115, %v142
    %s144 = sld [smem:[#allocation2 + $0x14]]
    %v145 = vstv %s144
    %v146 = vmul.f32 %v24, %v145
    %s147 = sld [smem:[#allocation2 + $0x15]]
    %v148 = vstv %s147
    %v149 = vmul.f32 %v26, %v148
    %v150 = vadd.f32 %v146, %v149
    %s151 = sld [smem:[#allocation2 + $0x16]]
    %v152 = vstv %s151
    %v153 = vmul.f32 %v28, %v152
    %v154 = vadd.f32 %v150, %v153
    %s155 = sld [smem:[#allocation2 + $0x17]]
    %v156 = vstv %s155
    %v157 = vmul.f32 %v30, %v156
    %v158 = vadd.f32 %v154, %v157
    %s159 = sld [smem:[#allocation2 + $0x18]]
    %v160 = vstv %s159
    %v161 = vmul.f32 %v32, %v160
    %v162 = vadd.f32 %v158, %v161
    %s163 = sld [smem:[#allocation2 + $0x1d]]
    %v164 = vstv %s163
    %v165 = vadd.f32 %v162, %v164
    %v166 = vmul.f32 %v165, 0.01
    %v167 = vmax.f32 %v165, %v166
    %s168 = sld [smem:[#allocation2 + $0x22]]
    %v169 = vstv %s168
    %v170 = vmul.f32 %v167, %v169
    %v171 = vadd.f32 %v143, %v170
    %s172 = sld [smem:[#allocation2 + $0x23]]
    %v173 = vstv %s172
    %v174 = vadd.f32 %v171, %v173
    %175 = vst [vmem:[%s2] sm:$0xff] %v174
    // Predicated region
    $region14: #{basic_decoding_pallas.1} parent=1 // pred_check
      _
    $region15: #{basic_decoding_pallas.1} parent=1 // pred_check_branch
      %177 = sbr.rel (0) target = $region17
    $region16: #{basic_decoding_pallas.1} parent=1 // pred_region
      _
    $region17: #{basic_decoding_pallas.1} parent=1 // pred_fallthru
      _
    // Predicated region
    $region18: #{basic_decoding_pallas.1} parent=1 // pred_check
      _
    $region19: #{basic_decoding_pallas.1} parent=1 // pred_check_branch
      %179 = sbr.rel (0) target = $region21
    $region20: #{basic_decoding_pallas.1} parent=1 // pred_region
      _
    $region21: #{basic_decoding_pallas.1} parent=1 // pred_fallthru
      _
    %180 = vsyncpa [#allocation3], 1

</llo_original>
